<compile_context>
chip_gen: v7x
topology: tpu7x:2x2x1
jax: 0.10.0
libtpu: 0.0.40
codegen_flags: <defaults>
</compile_context>

<pallas_src>
import jax
import jax.numpy as jnp
from jax import lax
from jax.experimental import pallas as pl
from jax.experimental.pallas import tpu as pltpu


def lstm_last_kernel(maxlen_ref, gx_ref, len_ref, whh_ref, out_ref):
    """One batch tile: run the LSTM recurrence over the tile's max sequence
    length, freezing (h, c) for rows that already ended, then write the last
    valid hidden state."""
    tm = gx_ref.shape[1]
    H = whh_ref.shape[0]

    lens = len_ref[...]                          # [tm, 1] int32 (hoisted, loop-invariant)
    n_steps = maxlen_ref[pl.program_id(0)]       # per-tile trip count (SMEM scalar)

    def step(t, carry):
        h_prev, c_prev = carry
        # x-projection + bias were hoisted into gx (computed via a single
        # gather of the folded [vocab,4H] table in the wrapper); only the
        # recurrent matmul remains on the serial critical path.
        pre = gx_ref[t].astype(jnp.float32) + jnp.dot(
            h_prev.astype(whh_ref.dtype), whh_ref[...],
            preferred_element_type=jnp.float32)                 # [tm, 4H]
        i_g = jax.nn.sigmoid(pre[:, 0 * H:1 * H])
        f_g = jax.nn.sigmoid(pre[:, 1 * H:2 * H])
        g_g = jnp.tanh(pre[:, 2 * H:3 * H])
        o_g = jax.nn.sigmoid(pre[:, 3 * H:4 * H])
        c_new = f_g * c_prev + i_g * g_g
        h_new = o_g * jnp.tanh(c_new)
        valid = t < lens                                        # [tm,1] -> broadcasts over H
        return (jnp.where(valid, h_new, h_prev),
                jnp.where(valid, c_new, c_prev))

    h0 = jnp.zeros((tm, H), jnp.float32)
    c0 = jnp.zeros((tm, H), jnp.float32)
    h_last, _ = lax.fori_loop(0, n_steps, step, (h0, c0))
    out_ref[...] = h_last.astype(out_ref.dtype)


def _pick_batch_tile(m, T, H, itemsize, stream_budget_bytes=20 * 1024 * 1024):
    """Largest batch tile (multiple of 8, <= 512) whose double-buffered
    streamed gate slab fits the VMEM budget (sized for v7x's 64 MiB)."""
    row_bytes = T * 4 * H * itemsize
    tm = stream_budget_bytes // max(1, 2 * row_bytes)
    tm = int(max(8, min(512, tm)))
    tm -= tm % 8
    m8 = ((m + 7) // 8) * 8                      # don't over-pad tiny batches
    return max(8, min(tm, m8))


def embednet_forward(X_ids, X_num_1d_tokens, params, *, mxu_dtype=jnp.float32):
    """[m, T] int ids, [m] lengths -> [m, H] last valid LSTM hidden state."""
    E_table, w_ih, w_hh, bias = params           # [V,E], [E,4H], [H,4H], [1,4H]
    m, T = X_ids.shape
    H = w_hh.shape[0]

    # Fold embedding + input projection + bias:  G[v] = E[v] @ W_ih + b.
    G = (E_table @ w_ih + bias).astype(mxu_dtype)             # [V, 4H]

    itemsize = jnp.dtype(mxu_dtype).itemsize
    tm = _pick_batch_tile(m, T, H, itemsize)
    m_pad = ((m + tm - 1) // tm) * tm
    num_tiles = m_pad // tm

    ids = jnp.zeros((m_pad, T), jnp.int32).at[:m].set(X_ids.astype(jnp.int32))
    lens = jnp.ones((m_pad,), jnp.int32).at[:m].set(
        X_num_1d_tokens.astype(jnp.int32))

    # Gather straight into time-major layout: transpose the cheap int ids,
    # not the embedded activations.
    gates_x = G[ids.T]                                        # [T, m_pad, 4H]
    lens2d = lens.reshape(m_pad, 1)
    max_len = jnp.max(lens.reshape(num_tiles, tm), axis=1)    # [num_tiles] int32

    w_hh_c = w_hh.astype(mxu_dtype)

    needed = 2 * (T * tm * 4 * H * itemsize       # streamed gate slab (double buffered)
                  + H * 4 * H * itemsize          # resident W_hh
                  + tm * H * 4 + tm * 4)          # out tile + lengths tile
    vmem_limit = int(min(64 * 1024 * 1024, max(4 * needed, 16 * 1024 * 1024)))

    out = pl.pallas_call(
        lstm_last_kernel,
        out_shape=jax.ShapeDtypeStruct((m_pad, H), jnp.float32),
        grid_spec=pltpu.PrefetchScalarGridSpec(
            num_scalar_prefetch=1,
            grid=(num_tiles,),
            in_specs=[
                pl.BlockSpec((T, tm, 4 * H), lambda i, ml: (0, i, 0)),  # gates_x
                pl.BlockSpec((tm, 1), lambda i, ml: (i, 0)),            # lengths
                pl.BlockSpec((H, 4 * H), lambda i, ml: (0, 0)),         # W_hh (resident)
            ],
            out_specs=pl.BlockSpec((tm, H), lambda i, ml: (i, 0)),
        ),
        compiler_params=pltpu.CompilerParams(
            dimension_semantics=("parallel",),
            vmem_limit_bytes=vmem_limit,
        ),
    )(max_len, gates_x, lens2d, w_hh_c)
    return out[:m]


def reference_forward(X_ids, X_num_1d_tokens, params):
    """Pure-JAX reference (same math, lax.scan, unfolded embedding)."""
    E_table, w_ih, w_hh, bias = params
    m, T = X_ids.shape
    H = w_hh.shape[0]
    X_emb = E_table[X_ids]                            # [m, T, E]
    h0 = jnp.zeros((m, H), jnp.float32)
    c0 = jnp.zeros((m, H), jnp.float32)

    def step(carry, inp):
        h, c = carry
        x_t, t = inp
        pre = x_t @ w_ih + h @ w_hh + bias            # [m, 4H]
        i_g = jax.nn.sigmoid(pre[:, 0 * H:1 * H])
        f_g = jax.nn.sigmoid(pre[:, 1 * H:2 * H])
        g_g = jnp.tanh(pre[:, 2 * H:3 * H])
        o_g = jax.nn.sigmoid(pre[:, 3 * H:4 * H])
        c_new = f_g * c + i_g * g_g
        h_new = o_g * jnp.tanh(c_new)
        valid = (t < X_num_1d_tokens).reshape(m, 1)
        return (jnp.where(valid, h_new, h),
                jnp.where(valid, c_new, c)), None

    xs = (jnp.transpose(X_emb, (1, 0, 2)), jnp.arange(T))
    (h_last, _), _ = lax.scan(step, (h0, c0), xs)
    return h_last


def make_params(key, vocab, e_dim, h_dim):
    k1, k2, k3, k4 = jax.random.split(key, 4)
    E_table = jax.random.normal(k1, (vocab, e_dim), jnp.float32) * 0.1
    # gate order i, f, g, o (matches nn.LSTM), fused along the last dim.
    w_ih = jax.random.normal(k2, (e_dim, 4 * h_dim), jnp.float32) * 0.1
    w_hh = jax.random.normal(k3, (h_dim, 4 * h_dim), jnp.float32) * 0.1
    bias = jax.random.normal(k4, (1, 4 * h_dim), jnp.float32) * 0.1
    return E_table, w_ih, w_hh, bias


if __name__ == "__main__":
    m, T = 2, 8           # batch, max_num_1d_tokens
    vocab, e_dim, h_dim = 20, 16, 32

    key = jax.random.PRNGKey(0)
    kp, ki, kl = jax.random.split(key, 3)
    params = make_params(kp, vocab, e_dim, h_dim)

    X_ids = jax.random.randint(ki, (m, T), 0, vocab, dtype=jnp.int32)
    X_num_1d_tokens = jax.random.randint(kl, (m,), 1, T + 1, dtype=jnp.int32)

    # f32 MXU operands keep the tight tolerance check below; for production on
    # v6e/v7x pass mxu_dtype=jnp.bfloat16 (elementwise math stays f32).
    y = embednet_forward(X_ids, X_num_1d_tokens, params)
    y = jax.block_until_ready(y)

    y_ref = reference_forward(X_ids, X_num_1d_tokens, params)
    assert y.shape == (m, h_dim)
    assert jnp.allclose(y, y_ref, atol=2e-5, rtol=1e-4), "mismatch vs reference"

    print("KERNEL_OK")
</pallas_src>

<mosaic_0001>
module attributes {stable_mosaic.version = 11 : i64} {
  func.func @lstm_last_kernel(%arg0: i32, %arg1: memref<1xi32, #tpu.memory_space<smem>>, %arg2: memref<8x8x128xf32, #tpu.memory_space<vmem>>, %arg3: memref<8x1xi32, #tpu.memory_space<vmem>>, %arg4: memref<32x128xf32, #tpu.memory_space<vmem>>, %arg5: memref<8x32xf32, #tpu.memory_space<vmem>>) attributes {dimension_semantics = [#tpu.dimension_semantics<parallel>], iteration_bounds = array<i64: 1>, scalar_prefetch = 1 : i64, scratch_operands = 0 : i64, tpu.core_type = #tpu.core_type<tc>, window_params = [{transform_indices = @transform_0, window_bounds = array<i64: 8, 8, 128>}, {transform_indices = @transform_1, window_bounds = array<i64: 8, 1>}, {pipeline_mode = #tpu.pipeline_mode<synchronous>, transform_indices = @transform_2, window_bounds = array<i64: 32, 128>}, {transform_indices = @transform_3, window_bounds = array<i64: 8, 32>}]} {
    %c0 = arith.constant 0 : index
    %c0_0 = arith.constant 0 : index
    %0 = vector.load %arg3[%c0, %c0_0] : memref<8x1xi32, #tpu.memory_space<vmem>>, vector<8x1xi32>
    %1 = arith.index_cast %arg0 : i32 to index
    %2 = memref.load %arg1[%1] : memref<1xi32, #tpu.memory_space<smem>>
    %cst = arith.constant 0.000000e+00 : f32
    %3 = vector.broadcast %cst : f32 to vector<8x32xf32>
    %cst_1 = arith.constant 0.000000e+00 : f32
    %4 = vector.broadcast %cst_1 : f32 to vector<8x32xf32>
    %c0_i32 = arith.constant 0 : i32
    %5 = arith.subi %2, %c0_i32 : i32
    %6 = arith.addi %c0_i32, %5 : i32
    %c1_i32 = arith.constant 1 : i32
    %7:2 = scf.for %arg6 = %c0_i32 to %6 step %c1_i32 iter_args(%arg7 = %3, %arg8 = %4) -> (vector<8x32xf32>, vector<8x32xf32>)  : i32 {
      %9 = arith.index_cast %arg6 : i32 to index
      %c0_4 = arith.constant 0 : index
      %c0_5 = arith.constant 0 : index
      %10 = vector.load %arg2[%9, %c0_4, %c0_5] : memref<8x8x128xf32, #tpu.memory_space<vmem>>, vector<1x8x128xf32>
      %11 = vector.shape_cast %10 : vector<1x8x128xf32> to vector<8x128xf32>
      %c0_6 = arith.constant 0 : index
      %c0_7 = arith.constant 0 : index
      %12 = vector.load %arg4[%c0_6, %c0_7] : memref<32x128xf32, #tpu.memory_space<vmem>>, vector<32x128xf32>
      %cst_8 = arith.constant dense<0.000000e+00> : vector<8x128xf32>
      %13 = tpu.matmul %arg7, %12, %cst_8 {dimension_numbers = #tpu.dot_dimension_numbers<[1], [0], [0], [1], [0, 0, 1, 1], [], []>} : vector<8x32xf32>, vector<32x128xf32>, vector<8x128xf32> -> vector<8x128xf32>
      %14 = arith.addf %11, %13 : vector<8x128xf32>
      %15 = vector.extract_strided_slice %14 {offsets = [0, 0], sizes = [8, 32], strides = [1, 1]} : vector<8x128xf32> to vector<8x32xf32>
      %16 = arith.negf %15 : vector<8x32xf32>
      %17 = math.exp %16 : vector<8x32xf32>
      %cst_9 = arith.constant 1.000000e+00 : f32
      %18 = vector.broadcast %cst_9 : f32 to vector<8x32xf32>
      %19 = arith.addf %18, %17 : vector<8x32xf32>
      %20 = arith.divf %18, %19 : vector<8x32xf32>
      %21 = vector.extract_strided_slice %14 {offsets = [0, 32], sizes = [8, 32], strides = [1, 1]} : vector<8x128xf32> to vector<8x32xf32>
      %22 = arith.negf %21 : vector<8x32xf32>
      %23 = math.exp %22 : vector<8x32xf32>
      %cst_10 = arith.constant 1.000000e+00 : f32
      %24 = vector.broadcast %cst_10 : f32 to vector<8x32xf32>
      %25 = arith.addf %24, %23 : vector<8x32xf32>
      %26 = arith.divf %24, %25 : vector<8x32xf32>
      %27 = vector.extract_strided_slice %14 {offsets = [0, 64], sizes = [8, 32], strides = [1, 1]} : vector<8x128xf32> to vector<8x32xf32>
      %28 = math.tanh %27 : vector<8x32xf32>
      %29 = vector.extract_strided_slice %14 {offsets = [0, 96], sizes = [8, 32], strides = [1, 1]} : vector<8x128xf32> to vector<8x32xf32>
      %30 = arith.negf %29 : vector<8x32xf32>
      %31 = math.exp %30 : vector<8x32xf32>
      %cst_11 = arith.constant 1.000000e+00 : f32
      %32 = vector.broadcast %cst_11 : f32 to vector<8x32xf32>
      %33 = arith.addf %32, %31 : vector<8x32xf32>
      %34 = arith.divf %32, %33 : vector<8x32xf32>
      %35 = arith.mulf %26, %arg8 : vector<8x32xf32>
      %36 = arith.mulf %20, %28 : vector<8x32xf32>
      %37 = arith.addf %35, %36 : vector<8x32xf32>
      %38 = math.tanh %37 : vector<8x32xf32>
      %39 = arith.mulf %34, %38 : vector<8x32xf32>
      %40 = vector.broadcast %arg6 : i32 to vector<8x1xi32>
      %41 = arith.cmpi slt, %40, %0 : vector<8x1xi32>
      %42 = vector.shape_cast %41 : vector<8x1xi1> to vector<8x1xi1>
      %43 = vector.broadcast %42 : vector<8x1xi1> to vector<8x32xi1>
      %44 = arith.select %43, %39, %arg7 : vector<8x32xi1>, vector<8x32xf32>
      %45 = vector.shape_cast %41 : vector<8x1xi1> to vector<8x1xi1>
      %46 = vector.broadcast %45 : vector<8x1xi1> to vector<8x32xi1>
      %47 = arith.select %46, %37, %arg8 : vector<8x32xi1>, vector<8x32xf32>
      scf.yield %44, %47 : vector<8x32xf32>, vector<8x32xf32>
    }
    %c0_2 = arith.constant 0 : index
    %c0_3 = arith.constant 0 : index
    %8 = vector.load %arg5[%c0_2, %c0_3] : memref<8x32xf32, #tpu.memory_space<vmem>>, vector<8x32xf32>
    tpu.vector_store %arg5[%c0_2, %c0_3], %7#0 {strides = array<i32>} : memref<8x32xf32, #tpu.memory_space<vmem>>, vector<8x32xf32>,
    return
  }
  func.func @transform_0(%arg0: i32, %arg1: memref<1xi32, #tpu.memory_space<smem>>) -> (i32, i32, i32) {
    %c0_i32 = arith.constant 0 : i32
    %c0_i32_0 = arith.constant 0 : i32
    %c0_i32_1 = arith.constant 0 : i32
    return %c0_i32, %arg0, %c0_i32_0 : i32, i32, i32
  }
  func.func @transform_1(%arg0: i32, %arg1: memref<1xi32, #tpu.memory_space<smem>>) -> (i32, i32) {
    %c0_i32 = arith.constant 0 : i32
    %c0_i32_0 = arith.constant 0 : i32
    return %arg0, %c0_i32 : i32, i32
  }
  func.func @transform_2(%arg0: i32, %arg1: memref<1xi32, #tpu.memory_space<smem>>) -> (i32, i32) {
    %c0_i32 = arith.constant 0 : i32
    %c0_i32_0 = arith.constant 0 : i32
    %c0_i32_1 = arith.constant 0 : i32
    return %c0_i32, %c0_i32_0 : i32, i32
  }
  func.func @transform_3(%arg0: i32, %arg1: memref<1xi32, #tpu.memory_space<smem>>) -> (i32, i32) {
    %c0_i32 = arith.constant 0 : i32
    %c0_i32_0 = arith.constant 0 : i32
    return %arg0, %c0_i32 : i32, i32
  }
}

</mosaic_0001>

<llo_original>
// kernel: tpu_custom_call.1
$region0: #{tpu_custom_call.1}
  #allocation0 [shape = 'u32[]', space=smem, size = 0x4, offset = 0x4, fixed_abs, tag = 'smem constant byte address 0x4 - core index']
  #allocation1 [shape = 'u32[144,128]{1,0:T(1,128)}', space=vmem, size = 0x12000, scoped, tag = 'internal scratch']
  #allocation2 [shape = 's32[1]{0}', space=sflag, size = 0x4, scoped, tag = 'scoped memory for tpu_custom_call.1']
  #allocation3 [shape = 's32[1]{0:T(128)S(6)}', space=smem, size = 0x200, scoped, tag = 'prefetched SMEM operand 0']
  %s0 = inlined_call_operand.<no memory space> [shape: s32[1], index: 0, kind: input, shape index: {}]
  %s1 = inlined_call_operand.hbm [shape: f32[8,8,128], index: 1, kind: input, shape index: {}]
  %s2 = inlined_call_operand.vmem [shape: s32[8,1], index: 2, kind: input, shape index: {}]
  %s3 = inlined_call_operand.hbm [shape: f32[32,128], index: 3, kind: input, shape index: {}]
  %s4 = inlined_call_operand.hbm [shape: f32[8,32], index: 4, kind: output, shape index: {}]
  %s5 = sld [smem:[#allocation0]]
  $region37: #{tpu_custom_call.1} parent=0
    _
  %s7 = ssub.s32 1, %s5
  %s8 = scalar_select 0, %s7, %s5
  %9 = sst [smem:[#allocation3]] %s0
  $region1: #{tpu_custom_call.1} parent=0
    #allocation4 [shape = 'u8[32768]{0}', space=vmem, size = 0x8000, scoped, tag = 'input window, operand 1, single buffered']
    #allocation5 [shape = 's32[1]{0}', space=sflag, size = 0x4, scoped, tag = 'scoped memory for tpu_custom_call.1']
    #allocation6 [shape = 's32[1]{0}', space=sflag, size = 0x4, scoped, tag = 'scoped memory for tpu_custom_call.1']
    #allocation7 [shape = 'u8[16384]{0}', space=vmem, size = 0x4000, scoped, tag = 'input window, operand 3, single buffered']
    #allocation8 [shape = 's32[1]{0}', space=sflag, size = 0x4, scoped, tag = 'scoped memory for tpu_custom_call.1']
    #allocation9 [shape = 'u8[4096]{0}', space=vmem, size = 0x1000, scoped, tag = 'output window, operand 0, single buffered']
    %10 = vsyncpa [#allocation5], 0
    %11 = vsyncpa [#allocation8], 0
    %12 = vsyncpa [#allocation6], 0
    // Predicated region
    $region2: #{tpu_custom_call.1} parent=1 // pred_check
      _
    $region3: #{tpu_custom_call.1} parent=1 // pred_check_branch
      %14 = sbr.rel (0) target = $region5
    $region4: #{tpu_custom_call.1} parent=1 // pred_region
      %s16 = ssub.s32 1024, 1024
      %17 = vsyncadd [#allocation5], %s16
      %s18 = sshll.u32 [#allocation4], 4
      %s19 = int_to_ptr.vmem [resolvable:$true] %s18
      %24 = dma.hbm_to_vmem [thread:$0]  %s1, 1024, %s19, [#allocation5], 128, 128, 8
    $region5: #{tpu_custom_call.1} parent=1 // pred_fallthru
      _
    // Predicated region
    $region6: #{tpu_custom_call.1} parent=1 // pred_check
      _
    $region7: #{tpu_custom_call.1} parent=1 // pred_check_branch
      %26 = sbr.rel (0) target = $region9
    $region8: #{tpu_custom_call.1} parent=1 // pred_region
      _
    $region9: #{tpu_custom_call.1} parent=1 // pred_fallthru
      _
    // Predicated region
    $region10: #{tpu_custom_call.1} parent=1 // pred_check
      _
    $region11: #{tpu_custom_call.1} parent=1 // pred_check_branch
      %28 = sbr.rel (0) target = $region13
    $region12: #{tpu_custom_call.1} parent=1 // pred_region
      %s30 = ssub.s32 512, 512
      %31 = vsyncadd [#allocation8], %s30
      %s32 = sshll.u32 [#allocation7], 4
      %s33 = int_to_ptr.vmem [resolvable:$true] %s32
      %38 = dma.hbm_to_vmem [thread:$0]  %s3, 512, %s33, [#allocation8], 128, 128, 8
    $region13: #{tpu_custom_call.1} parent=1 // pred_fallthru
      _
    // Predicated region
    $region14: #{tpu_custom_call.1} parent=1 // pred_check
      _
    $region15: #{tpu_custom_call.1} parent=1 // pred_check_branch
      %40 = sbr.rel (0) target = $region17
    $region16: #{tpu_custom_call.1} parent=1 // pred_region
      %41 = dma.done [#allocation5], 1024
    $region17: #{tpu_custom_call.1} parent=1 // pred_fallthru
      _
    // Predicated region
    $region18: #{tpu_custom_call.1} parent=1 // pred_check
      _
    $region19: #{tpu_custom_call.1} parent=1 // pred_check_branch
      %43 = sbr.rel (0) target = $region21
    $region20: #{tpu_custom_call.1} parent=1 // pred_region
      %44 = dma.done [#allocation8], 512
    $region21: #{tpu_custom_call.1} parent=1 // pred_fallthru
      _
    %v45 = vld [vmem:[%s2] sm:$0xff]
    %s46 = sld [smem:[#allocation3]]
    // While loop
    $region22: #{tpu_custom_call.1} parent=1 // loop_pre_header
      _
    $region23: #{tpu_custom_call.1} parent=1 // loop_header
      %s48 = sphi 0, %s50
      %p49 = scmp.ge.s32.totalorder %s48, %s46
      %v53 = vphi 0.0, %v170
      %v54 = vphi 0.0, %v171
    $region24: #{tpu_custom_call.1} parent=1 // loop_header_branch
      %52 = sbr.rel (%p49) target = $region28
    $region25: #{tpu_custom_call.1} parent=1 // loop_body
      %s55 = smul.u32 %s48, 8
      %s56 = scalar_lea.vmem [#allocation4], %s55
      %v57 = vld [vmem:[%s56] sm:$0xff]
      %v58 = vld [vmem:[#allocation7] sm:$0xff]
      %v59 = vld [vmem:[#allocation7 + $0x8] sm:$0xff]
      %v60 = vld [vmem:[#allocation7 + $0x10] sm:$0xff]
      %v61 = vld [vmem:[#allocation7 + $0x18] sm:$0xff]
      %63 = vrot.lane.b32.xlu0 %v53, 32
      %v64 = vpop.permute.xlu0 %63
      %vm65 = vcmask 261120
      %v66 = vsel %vm65, %v64, 0
      %68 = vmatprep.subr.mxu0 0.0
      %69 = vmatpush1.msra.mxu0 %v58
      %70 = vmatprep.subr.mxu0 0.0
      %71 = vmatpush1.msra.mxu0 %v59
      %72 = vmatprep.subr.mxu0 0.0
      %73 = vmatpush1.msra.mxu0 %v60
      %74 = vmatprep.subr.mxu0 0.0
      %75 = vmatpush1.msra.mxu0 %v61
      %76 = vmatprep.subr.mxu0 0.0
      %77 = vmatpush1.msra.mxu0 0.0
      %78 = vmatprep.subr.mxu0 0.0
      %79 = vmatpush1.msra.mxu0 0.0
      %80 = vmatprep.subr.mxu0 0.0
      %81 = vmatpush1.msra.mxu0 0.0
      %82 = vmatprep.subr.mxu0 0.0
      %83 = vmatpush1.msra.mxu0 0.0
      %84 = vmatprep.subr.mxu0 0.0
      %85 = vmatpush1.msra.mxu0 0.0
      %86 = vmatprep.subr.mxu0 0.0
      %87 = vmatpush1.msra.mxu0 0.0
      %88 = vmatprep.subr.mxu0 0.0
      %89 = vmatpush1.msra.mxu0 0.0
      %90 = vmatprep.subr.mxu0 0.0
      %91 = vmatpush1.msra.mxu0 0.0
      %92 = vmatprep.subr.mxu0 0.0
      %93 = vmatpush1.msra.mxu0 0.0
      %94 = vmatprep.subr.mxu0 0.0
      %95 = vmatpush1.msra.mxu0 0.0
      %96 = vmatprep.subr.mxu0 0.0
      %97 = vmatpush1.msra.mxu0 0.0
      %98 = vmatprep.subr.mxu0 0.0
      %99 = vmatpush1.msra.mxu0 0.0
      %100 = vmatprep.subr.mxu0 0.0
      %101 = vmatpush1.msra.mxu0 0.0
      %102 = vmatprep.subr.mxu0 0.0
      %103 = vmatpush1.msra.mxu0 0.0
      %104 = vmatprep.subr.mxu0 0.0
      %105 = vmatpush1.msra.mxu0 0.0
      %106 = vmatprep.subr.mxu0 0.0
      %107 = vmatpush1.msra.mxu0 0.0
      %108 = vmatprep.subr.mxu0 0.0
      %109 = vmatpush1.msra.mxu0 0.0
      %110 = vmatprep.subr.mxu0 0.0
      %111 = vmatpush1.msra.mxu0 0.0
      %112 = vmatprep.subr.mxu0 0.0
      %113 = vmatpush1.msra.mxu0 0.0
      %114 = vmatprep.subr.mxu0 0.0
      %115 = vmatpush1.msra.mxu0 0.0
      %116 = vmatprep.subr.mxu0 0.0
      %117 = vmatpush1.msra.mxu0 0.0
      %118 = vmatprep.subr.mxu0 0.0
      %119 = vmatpush1.msra.mxu0 0.0
      %120 = vmatprep.subr.mxu0 0.0
      %121 = vmatpush1.msra.mxu0 0.0
      %122 = vmatprep.subr.mxu0 0.0
      %123 = vmatpush1.msra.mxu0 0.0
      %124 = vmatprep.subr.mxu0 0.0
      %125 = vmatpush1.msra.mxu0 0.0
      %126 = vmatprep.subr.mxu0 0.0
      %127 = vmatpush1.msra.mxu0 0.0
      %128 = vmatprep.subr.mxu0 0.0
      %129 = vmatpush1.msra.mxu0 0.0
      %130 = vmatprep.subr.mxu0 0.0
      %131 = vmatpush1.msra.mxu0 0.0
      %132 = vmatprep.mubr.f32.mxu0 0.0
      %133 = vmatmul.mubr.f32.gmra.mrb[0].mxu0 %v66
      %v134 = vpop.f32.mrb[0].mxu0
      %v135 = vadd.f32 0.0, %v134
      %v136 = vpop.f32.mrb[0].mxu0
      %137 = vdwg.mxu0
      %v138 = vadd.f32 %v57, %v135
      %v139 = vxor.u32 %v138, 2147483648
      %v140 = vmul.f32 %v139, 1.442695
      %v141 = vpow.pop %v140
      %v142 = vadd.f32 %v141, 1.0
      %v143 = vrcp.pop %v142
      %v144 = vmul.f32 1.0, %v143
      %v145 = vtanh.pop %v138
      %v146 = vmul.f32 %v144, %v54
      %148 = vrot.lane.b32.xlu0 %v145, 64
      %v149 = vpop.permute.xlu0 %148
      %v151 = vmul.f32 %v144, %v149
      %153 = vrot.lane.b32.xlu0 %v151, 32
      %v154 = vpop.permute.xlu0 %153
      %v156 = vadd.f32 %v146, %v154
      %v157 = vtanh.pop %v156
      %159 = vrot.lane.b32.xlu0 %v157, 64
      %v160 = vpop.permute.xlu0 %159
      %v162 = vmul.f32 %v144, %v160
      %v163 = vstv %s48
      %vm164 = vcmp.lt.s32.totalorder %v163, %v45
      %v165 = vsel %vm164, 1, 0
      %166 = vset.pattern.permute.xlu0 0
      %167 = vperm.xlu0 %166, %v165
      %v168 = vpop.permute.xlu0 %167
      %vm169 = vcmp.eq.s32.totalorder %v168, 1
      %v170 = vsel %vm169, %v162, %v53
      %v171 = vsel %vm169, %v156, %v54
    $region26: #{tpu_custom_call.1} parent=1 // loop_footer
      %s50 = sadd.s32 %s48, 1
    $region27: #{tpu_custom_call.1} parent=1 // loop_footer_branch
      %47 = sbr.rel target = $region23
    $region28: #{tpu_custom_call.1} parent=1 // loop_exit
      _
    %173 = vrot.lane.b32.xlu0 %v53, 32
    %v174 = vpop.permute.xlu0 %173
    %vm176 = vcmask 261120
    %177 = vst.msk [vmem:[#allocation9] sm:$0xff] %vm176, %v174
    // Predicated region
    $region29: #{tpu_custom_call.1} parent=1 // pred_check
      _
    $region30: #{tpu_custom_call.1} parent=1 // pred_check_branch
      %179 = sbr.rel (0) target = $region32
    $region31: #{tpu_custom_call.1} parent=1 // pred_region
      %s181 = ssub.s32 128, 128
      %182 = vsyncadd [#allocation6], %s181
      %s184 = sshll.u32 [#allocation9], 4
      %s185 = int_to_ptr.vmem [resolvable:$true] %s184
      %187 = dma.vmem_to_hbm [thread:$0]  %s185, 128, %s4, [#allocation6]
    $region32: #{tpu_custom_call.1} parent=1 // pred_fallthru
      _
    // Predicated region
    $region33: #{tpu_custom_call.1} parent=1 // pred_check
      _
    $region34: #{tpu_custom_call.1} parent=1 // pred_check_branch
      %189 = sbr.rel (0) target = $region36
    $region35: #{tpu_custom_call.1} parent=1 // pred_region
      %190 = dma.done [#allocation6], 128
    $region36: #{tpu_custom_call.1} parent=1 // pred_fallthru
      _
    %191 = vsyncpa [#allocation5], 1
    %192 = vsyncpa [#allocation8], 1
    %193 = vsyncpa [#allocation6], 1

</llo_original>
